<compile_context>
chip_gen: v5e
topology: v5e:2x2
jax: 0.10.0
libtpu: 0.0.40
codegen_flags: <defaults>
</compile_context>

<pallas_src>
import functools

import jax
import jax.numpy as jnp
from jax import lax
from jax.experimental import pallas as pl
from jax.experimental.pallas import tpu as pltpu

_MiB = 1024 * 1024


def _cfconv_s2v_kernel(s_ref, ev_ref, w_ref, b_ref, g_ref, bt_ref, o_ref,
                       sp_ref, *, recompute_sp):
    # s_ref  : (bblk, N, H)       node features for this batch block
    # ev_ref : (bblk, 3*ti, N)    pre-masked edge vectors, row index = i*3 + c
    # w_ref  : (H, H)             lin1 weight (laid out for x @ W)
    # b_ref  : (1, H)             lin1 bias
    # g_ref  : (1, H)             LayerNorm gamma
    # bt_ref : (1, H)             LayerNorm beta
    # o_ref  : (bblk, 3*ti, H)    output block (row index = i*3 + c)
    # sp_ref : (bblk, N, H)       VMEM scratch: lin1(s), in the aggregation dtype
    bblk, n, hdim = s_ref.shape

    def _compute_sp():
        # Merged (bblk*N, H) @ (H, H) matmul.  The reshape is layout-free: the
        # planner only picks bblk > 1 when N is a multiple of 8 (sublane rule).
        x = s_ref[...].reshape(bblk * n, hdim)
        # NOTE: with f32 operands the MXU uses the default (reduced) f32 path;
        # pass precision=lax.Precision.HIGHEST here if strict f32 is required.
        h = jnp.dot(x, w_ref[...], preferred_element_type=jnp.float32)
        h = h + b_ref[...].astype(jnp.float32)
        mu = jnp.mean(h, axis=-1, keepdims=True)
        var = jnp.mean(h * h, axis=-1, keepdims=True) - mu * mu      # one-pass
        hn = (h - mu) * lax.rsqrt(var + 1e-5)
        hn = hn * g_ref[...].astype(jnp.float32) + bt_ref[...].astype(jnp.float32)
        sp = hn * jax.nn.sigmoid(hn)                                  # SiLU (EUP)
        sp_ref[...] = sp.reshape(bblk, n, hdim).astype(sp_ref.dtype)

    if recompute_sp:
        # i axis is megacore-parallel in this mode; recompute lin1 every step.
        _compute_sp()
    else:
        pl.when(pl.program_id(1) == 0)(_compute_sp)

    # --- masked edge-vector aggregation: one (3*ti, N) @ (N, H) per batch ----
    # out[(i*3+c), h] = sum_j ev_masked[i, c, j] * sp[j, h]
    def _agg(bb, carry):
        o_ref[bb] = jnp.dot(ev_ref[bb], sp_ref[bb],
                            preferred_element_type=jnp.float32).astype(o_ref.dtype)
        return carry

    lax.fori_loop(0, bblk, _agg, None, unroll=True)


def _divisors(n):
    return [d for d in range(1, n + 1) if n % d == 0]


def _plan(B, N, H, ev_itemsize, s_itemsize, out_itemsize):
    """Pick (batch-block, i-tile, vmem_limit_bytes), budgeting ALL VMEM residents."""
    try:
        info = pltpu.get_tpu_info()
        vmem_cap = int(getattr(info, "vmem_capacity_bytes", 64 * _MiB))
    except Exception:
        vmem_cap = 64 * _MiB                      # conservative: v7x per-TC physical
    # Working-set target: ~3/4 of physical VMEM, leaving headroom for
    # Mosaic-internal scratch; the actual limit is set from the chosen plan.
    target = max(12 * _MiB, (vmem_cap * 3) // 4)

    def total_bytes(bblk, ti):
        ev_blk = bblk * 3 * ti * N * ev_itemsize          # double-buffered
        s_blk = bblk * N * H * s_itemsize                 # double-buffered
        out_blk = bblk * 3 * ti * H * out_itemsize        # double-buffered
        sp = bblk * N * H * ev_itemsize                   # scratch, single buffer
        params = (H * H + 3 * H) * s_itemsize             # double-buffered
        return 2 * (ev_blk + s_blk + out_blk + params) + sp

    # (8,128) sublane rule on the second-to-last block dim:
    #   ev/out blocks need (3*ti) % 8 == 0 unless ti == N (full dim);
    #   the merged lin1 reshape wants N % 8 == 0 whenever bblk > 1.
    ti_cands = [d for d in _divisors(N) if (3 * d) % 8 == 0 or d == N]
    bb_cands = [d for d in _divisors(B) if d == 1 or N % 8 == 0]

    # 1) Full-row ev blocks (ti = N): grow bblk to amortize per-grid-step
    #    overhead, but keep B // bblk >= 2 so both v7x TensorCores get work.
    best_bblk = None
    for bblk in bb_cands:
        if bblk > 8 or (B >= 2 and B // bblk < 2):
            continue
        if total_bytes(bblk, N) <= target:
            best_bblk = bblk if best_bblk is None else max(best_bblk, bblk)
    if best_bblk is not None:
        bblk, ti = best_bblk, N
    else:
        # 2) One batch per step; largest i-tile that fits, preferring
        #    3*ti >= 256 so MXU rows stay full and grid steps stay few.
        bblk = 1
        fitting = [d for d in ti_cands if total_bytes(1, d) <= target]
        if fitting:
            good = [d for d in fitting if 3 * d >= 256 or d == N]
            ti = max(good) if good else max(fitting)
        else:
            ti = min(ti_cands)    # smallest legal tile; plan may exceed target

    total = total_bytes(bblk, ti)
    vmem_limit = int(min(max(vmem_cap - 2 * _MiB, 16 * _MiB),
                         max(total + 4 * _MiB, 16 * _MiB)))
    return bblk, ti, vmem_limit


def prepare_ev(ev, mask, out_dtype=None):
    """Fold the pair mask into ev and relayout to (B, 3N, N), row index = i*3+c.

    This is the only pass over the O(B*N^2) edge tensor outside the kernel.
    In GNNLF, ev/mask are shared by every CFConv interaction block: call this
    ONCE per model forward and reuse the result, so the relayout cost is
    amortized instead of tripling the per-call ev HBM traffic.  For f32 models,
    out_dtype=jnp.bfloat16 halves the dominant ev HBM stream (the aggregation
    matmul still accumulates in f32) at a small, quantifiable accuracy cost.
    The multiply and cast fuse into the last-two-dim transpose copy in XLA.
    """
    B, N, _, _ = ev.shape
    out_dtype = ev.dtype if out_dtype is None else out_dtype
    evm = ev * mask                                     # (B, N, N, 3)
    evm = jnp.transpose(evm, (0, 1, 3, 2))              # (B, N, 3, N)
    return evm.reshape(B, 3 * N, N).astype(out_dtype)   # (B, 3N, N)


def cfconv_s2v(s, ev_prepared, w, b, gamma, beta):
    """s: (B,N,H), ev_prepared: (B,3N,N) from prepare_ev -> (B,N,3,H)."""
    B, N, H = s.shape
    assert ev_prepared.shape == (B, 3 * N, N)

    bblk, ti, vmem_limit = _plan(
        B, N, H,
        jnp.dtype(ev_prepared.dtype).itemsize,
        jnp.dtype(s.dtype).itemsize,
        jnp.dtype(s.dtype).itemsize)
    grid = (B // bblk, N // ti)

    # If only one batch-grid step exists, recompute sp per i-tile so the i axis
    # can be megacore-parallel (lin1 recompute is hidden; kernel is HBM-bound).
    recompute_sp = (grid[0] < 2) and (grid[1] > 1)
    dim_sems = ("parallel", "parallel") if recompute_sp else ("parallel", "arbitrary")

    kernel = functools.partial(_cfconv_s2v_kernel, recompute_sp=recompute_sp)

    out = pl.pallas_call(
        kernel,
        out_shape=jax.ShapeDtypeStruct((B, 3 * N, H), s.dtype),
        grid=grid,
        in_specs=[
            pl.BlockSpec((bblk, N, H), lambda bi, ii: (bi, 0, 0)),         # s
            pl.BlockSpec((bblk, 3 * ti, N), lambda bi, ii: (bi, ii, 0)),   # ev (masked)
            pl.BlockSpec((H, H), lambda bi, ii: (0, 0)),                   # W
            pl.BlockSpec((1, H), lambda bi, ii: (0, 0)),                   # bias
            pl.BlockSpec((1, H), lambda bi, ii: (0, 0)),                   # gamma
            pl.BlockSpec((1, H), lambda bi, ii: (0, 0)),                   # beta
        ],
        out_specs=pl.BlockSpec((bblk, 3 * ti, H), lambda bi, ii: (bi, ii, 0)),
        scratch_shapes=[pltpu.VMEM((bblk, N, H), ev_prepared.dtype)],      # sp scratch
        compiler_params=pltpu.CompilerParams(
            dimension_semantics=dim_sems,
            vmem_limit_bytes=vmem_limit,
        ),
    )(s, ev_prepared, w, b, gamma, beta)

    return out.reshape(B, N, 3, H)   # free metadata reshape: (i*3+c) -> (i, c)


def cfconv_s2v_from_raw(s, ev, mask, w, b, gamma, beta, agg_dtype=None):
    """Convenience wrapper matching the PyTorch forward signature.

    Prefer calling prepare_ev once per model forward and reusing its output
    across all CFConv blocks; this wrapper pays the relayout every call.
    """
    return cfconv_s2v(s, prepare_ev(ev, mask, agg_dtype), w, b, gamma, beta)


def _reference(s, ev, mask, w, b, gamma, beta):
    # Pure-JAX mirror of the PyTorch forward (for correctness sanity check).
    h = s @ w + b
    mu = jnp.mean(h, axis=-1, keepdims=True)
    var = jnp.mean(jnp.square(h - mu), axis=-1, keepdims=True)
    hn = (h - mu) / jnp.sqrt(var + 1e-5) * gamma + beta
    sp = hn * jax.nn.sigmoid(hn)                         # (B, N, H)
    sm = sp[:, None, :, :] * mask                        # (B, N, N, H)
    v = sm[:, :, :, None, :] * ev[..., None]             # (B, N, N, 3, H)
    return jnp.sum(v, axis=2)                            # (B, N, 3, H)


if __name__ == "__main__":
    B, N, H = 2, 8, 32
    key = jax.random.PRNGKey(0)
    k_s, k_ev, k_m, k_w, k_b, k_g, k_bt = jax.random.split(key, 7)

    s = jax.random.normal(k_s, (B, N, H), dtype=jnp.float32)
    ev = jax.random.normal(k_ev, (B, N, N, 3), dtype=jnp.float32)
    mask = (jax.random.uniform(k_m, (B, N, N, 1)) > 0.3).astype(jnp.float32)

    # lin1 parameters (deterministic synthetic init). w is stored so that the
    # forward uses x @ w, i.e. w == PyTorch_weight.T.
    w = jax.random.normal(k_w, (H, H), dtype=jnp.float32) * (1.0 / jnp.sqrt(H))
    b = 0.1 * jax.random.normal(k_b, (1, H), dtype=jnp.float32)
    gamma = 1.0 + 0.1 * jax.random.normal(k_g, (1, H), dtype=jnp.float32)
    beta = 0.1 * jax.random.normal(k_bt, (1, H), dtype=jnp.float32)

    ref = _reference(s, ev, mask, w, b, gamma, beta)

    # f32 path (ev prepared once per "model forward", reused across blocks).
    ev_f32 = prepare_ev(ev, mask)
    out = jax.block_until_ready(cfconv_s2v(s, ev_f32, w, b, gamma, beta))
    assert out.shape == (B, N, 3, H)
    assert jnp.allclose(out, ref, atol=2e-4, rtol=2e-4), "f32 mismatch vs reference"

    # bf16 aggregation path for f32 models: halves the dominant ev HBM stream.
    ev_bf16 = prepare_ev(ev, mask, out_dtype=jnp.bfloat16)
    out_bf = jax.block_until_ready(cfconv_s2v(s, ev_bf16, w, b, gamma, beta))
    assert out_bf.shape == (B, N, 3, H)
    assert jnp.allclose(out_bf, ref, atol=0.2, rtol=0.1), "bf16 mismatch vs reference"

    # Full bf16 path.
    cast = lambda x: x.astype(jnp.bfloat16)
    out_full_bf = jax.block_until_ready(cfconv_s2v_from_raw(
        cast(s), cast(ev), cast(mask), cast(w), cast(b), cast(gamma), cast(beta)))
    assert out_full_bf.shape == (B, N, 3, H)
    assert jnp.allclose(out_full_bf.astype(jnp.float32), ref, atol=0.3, rtol=0.1), \
        "full-bf16 mismatch vs reference"

    print("KERNEL_OK")
</pallas_src>

<mosaic_0001>
module attributes {stable_mosaic.version = 11 : i64} {
  func.func @_cfconv_s2v_kernel(%arg0: i32, %arg1: i32, %arg2: memref<1x8x32xf32, #tpu.memory_space<vmem>>, %arg3: memref<1x24x8xf32, #tpu.memory_space<vmem>>, %arg4: memref<32x32xf32, #tpu.memory_space<vmem>>, %arg5: memref<1x32xf32, #tpu.memory_space<vmem>>, %arg6: memref<1x32xf32, #tpu.memory_space<vmem>>, %arg7: memref<1x32xf32, #tpu.memory_space<vmem>>, %arg8: memref<1x24x32xf32, #tpu.memory_space<vmem>>, %arg9: memref<1x8x32xf32, #tpu.memory_space<vmem>>) attributes {dimension_semantics = [#tpu.dimension_semantics<parallel>, #tpu.dimension_semantics<arbitrary>], iteration_bounds = array<i64: 2, 1>, scalar_prefetch = 0 : i64, scratch_operands = 1 : i64, tpu.core_type = #tpu.core_type<tc>, window_params = [{transform_indices = @transform_0, window_bounds = array<i64: 1, 8, 32>}, {transform_indices = @transform_1, window_bounds = array<i64: 1, 24, 8>}, {pipeline_mode = #tpu.pipeline_mode<synchronous>, transform_indices = @transform_2, window_bounds = array<i64: 32, 32>}, {pipeline_mode = #tpu.pipeline_mode<synchronous>, transform_indices = @transform_3, window_bounds = array<i64: 1, 32>}, {pipeline_mode = #tpu.pipeline_mode<synchronous>, transform_indices = @transform_4, window_bounds = array<i64: 1, 32>}, {pipeline_mode = #tpu.pipeline_mode<synchronous>, transform_indices = @transform_5, window_bounds = array<i64: 1, 32>}, {transform_indices = @transform_6, window_bounds = array<i64: 1, 24, 32>}]} {
    %c0_i32 = arith.constant 0 : i32
    %0 = arith.cmpi eq, %arg1, %c0_i32 : i32
    %1 = arith.extui %0 : i1 to i32
    %c0_i32_0 = arith.constant 0 : i32
    %2 = arith.cmpi ne, %1, %c0_i32_0 : i32
    scf.if %2 {
      %c0_7 = arith.constant 0 : index
      %c0_8 = arith.constant 0 : index
      %c0_9 = arith.constant 0 : index
      %14 = vector.load %arg2[%c0_7, %c0_8, %c0_9] : memref<1x8x32xf32, #tpu.memory_space<vmem>>, vector<1x8x32xf32>
      %15 = vector.shape_cast %14 : vector<1x8x32xf32> to vector<8x32xf32>
      %c0_10 = arith.constant 0 : index
      %c0_11 = arith.constant 0 : index
      %16 = vector.load %arg4[%c0_10, %c0_11] : memref<32x32xf32, #tpu.memory_space<vmem>>, vector<32x32xf32>
      %cst_12 = arith.constant dense<0.000000e+00> : vector<8x32xf32>
      %17 = tpu.matmul %15, %16, %cst_12 {dimension_numbers = #tpu.dot_dimension_numbers<[1], [0], [0], [1], [0, 0, 1, 1], [], []>} : vector<8x32xf32>, vector<32x32xf32>, vector<8x32xf32> -> vector<8x32xf32>
      %c0_13 = arith.constant 0 : index
      %c0_14 = arith.constant 0 : index
      %18 = vector.load %arg5[%c0_13, %c0_14] : memref<1x32xf32, #tpu.memory_space<vmem>>, vector<1x32xf32>
      %19 = vector.broadcast %18 : vector<1x32xf32> to vector<8x32xf32>
      %20 = arith.addf %17, %19 : vector<8x32xf32>
      %cst_15 = arith.constant dense<0.000000e+00> : vector<8xf32>
      %21 = vector.multi_reduction <add>, %20, %cst_15 [1] : vector<8x32xf32> to vector<8xf32>
      %22 = vector.shape_cast %21 : vector<8xf32> to vector<8x1xf32>
      %cst_16 = arith.constant 3.200000e+01 : f32
      %23 = vector.broadcast %cst_16 : f32 to vector<8x1xf32>
      %24 = arith.divf %22, %23 : vector<8x1xf32>
      %25 = arith.mulf %20, %20 : vector<8x32xf32>
      %cst_17 = arith.constant dense<0.000000e+00> : vector<8xf32>
      %26 = vector.multi_reduction <add>, %25, %cst_17 [1] : vector<8x32xf32> to vector<8xf32>
      %27 = vector.shape_cast %26 : vector<8xf32> to vector<8x1xf32>
      %cst_18 = arith.constant 3.200000e+01 : f32
      %28 = vector.broadcast %cst_18 : f32 to vector<8x1xf32>
      %29 = arith.divf %27, %28 : vector<8x1xf32>
      %30 = arith.mulf %24, %24 : vector<8x1xf32>
      %31 = arith.subf %29, %30 : vector<8x1xf32>
      %32 = vector.broadcast %24 : vector<8x1xf32> to vector<8x32xf32>
      %33 = arith.subf %20, %32 : vector<8x32xf32>
      %cst_19 = arith.constant 9.99999974E-6 : f32
      %34 = vector.broadcast %cst_19 : f32 to vector<8x1xf32>
      %35 = arith.addf %31, %34 : vector<8x1xf32>
      %36 = math.rsqrt %35 : vector<8x1xf32>
      %37 = vector.broadcast %36 : vector<8x1xf32> to vector<8x32xf32>
      %38 = arith.mulf %33, %37 : vector<8x32xf32>
      %c0_20 = arith.constant 0 : index
      %c0_21 = arith.constant 0 : index
      %39 = vector.load %arg6[%c0_20, %c0_21] : memref<1x32xf32, #tpu.memory_space<vmem>>, vector<1x32xf32>
      %40 = vector.broadcast %39 : vector<1x32xf32> to vector<8x32xf32>
      %41 = arith.mulf %38, %40 : vector<8x32xf32>
      %c0_22 = arith.constant 0 : index
      %c0_23 = arith.constant 0 : index
      %42 = vector.load %arg7[%c0_22, %c0_23] : memref<1x32xf32, #tpu.memory_space<vmem>>, vector<1x32xf32>
      %43 = vector.broadcast %42 : vector<1x32xf32> to vector<8x32xf32>
      %44 = arith.addf %41, %43 : vector<8x32xf32>
      %45 = arith.negf %44 : vector<8x32xf32>
      %46 = math.exp %45 : vector<8x32xf32>
      %cst_24 = arith.constant 1.000000e+00 : f32
      %47 = vector.broadcast %cst_24 : f32 to vector<8x32xf32>
      %48 = arith.addf %47, %46 : vector<8x32xf32>
      %49 = arith.divf %47, %48 : vector<8x32xf32>
      %50 = arith.mulf %44, %49 : vector<8x32xf32>
      %51 = vector.shape_cast %50 : vector<8x32xf32> to vector<1x8x32xf32>
      %c0_25 = arith.constant 0 : index
      %c0_26 = arith.constant 0 : index
      %c0_27 = arith.constant 0 : index
      %52 = vector.load %arg9[%c0_25, %c0_26, %c0_27] : memref<1x8x32xf32, #tpu.memory_space<vmem>>, vector<1x8x32xf32>
      tpu.vector_store %arg9[%c0_25, %c0_26, %c0_27], %51 {strides = array<i32>} : memref<1x8x32xf32, #tpu.memory_space<vmem>>, vector<1x8x32xf32>,
    } else {
    }
    %c0_i32_1 = arith.constant 0 : i32
    %3 = arith.index_cast %c0_i32_1 : i32 to index
    %c0 = arith.constant 0 : index
    %c0_2 = arith.constant 0 : index
    %4 = vector.load %arg3[%3, %c0, %c0_2] : memref<1x24x8xf32, #tpu.memory_space<vmem>>, vector<1x24x8xf32>
    %5 = vector.shape_cast %4 : vector<1x24x8xf32> to vector<24x8xf32>
    %6 = arith.index_cast %c0_i32_1 : i32 to index
    %c0_3 = arith.constant 0 : index
    %c0_4 = arith.constant 0 : index
    %7 = vector.load %arg9[%6, %c0_3, %c0_4] : memref<1x8x32xf32, #tpu.memory_space<vmem>>, vector<1x8x32xf32>
    %8 = vector.shape_cast %7 : vector<1x8x32xf32> to vector<8x32xf32>
    %cst = arith.constant dense<0.000000e+00> : vector<24x32xf32>
    %9 = tpu.matmul %5, %8, %cst {dimension_numbers = #tpu.dot_dimension_numbers<[1], [0], [0], [1], [0, 0, 1, 1], [], []>} : vector<24x8xf32>, vector<8x32xf32>, vector<24x32xf32> -> vector<24x32xf32>
    %10 = arith.index_cast %c0_i32_1 : i32 to index
    %c0_5 = arith.constant 0 : index
    %c0_6 = arith.constant 0 : index
    %11 = vector.load %arg8[%10, %c0_5, %c0_6] : memref<1x24x32xf32, #tpu.memory_space<vmem>>, vector<1x24x32xf32>
    %12 = vector.shape_cast %11 : vector<1x24x32xf32> to vector<24x32xf32>
    %13 = vector.shape_cast %9 : vector<24x32xf32> to vector<1x24x32xf32>
    tpu.vector_store %arg8[%10, %c0_5, %c0_6], %13 {strides = array<i32>} : memref<1x24x32xf32, #tpu.memory_space<vmem>>, vector<1x24x32xf32>,
    %c1_i32 = arith.constant 1 : i32
    return
  }
  func.func @transform_0(%arg0: i32, %arg1: i32) -> (i32, i32, i32) {
    %c0_i32 = arith.constant 0 : i32
    %c0_i32_0 = arith.constant 0 : i32
    %c0_i32_1 = arith.constant 0 : i32
    return %arg0, %c0_i32, %c0_i32_0 : i32, i32, i32
  }
  func.func @transform_1(%arg0: i32, %arg1: i32) -> (i32, i32, i32) {
    %c0_i32 = arith.constant 0 : i32
    %c0_i32_0 = arith.constant 0 : i32
    return %arg0, %arg1, %c0_i32 : i32, i32, i32
  }
  func.func @transform_2(%arg0: i32, %arg1: i32) -> (i32, i32) {
    %c0_i32 = arith.constant 0 : i32
    %c0_i32_0 = arith.constant 0 : i32
    %c0_i32_1 = arith.constant 0 : i32
    return %c0_i32, %c0_i32_0 : i32, i32
  }
  func.func @transform_3(%arg0: i32, %arg1: i32) -> (i32, i32) {
    %c0_i32 = arith.constant 0 : i32
    %c0_i32_0 = arith.constant 0 : i32
    %c0_i32_1 = arith.constant 0 : i32
    return %c0_i32, %c0_i32_0 : i32, i32
  }
  func.func @transform_4(%arg0: i32, %arg1: i32) -> (i32, i32) {
    %c0_i32 = arith.constant 0 : i32
    %c0_i32_0 = arith.constant 0 : i32
    %c0_i32_1 = arith.constant 0 : i32
    return %c0_i32, %c0_i32_0 : i32, i32
  }
  func.func @transform_5(%arg0: i32, %arg1: i32) -> (i32, i32) {
    %c0_i32 = arith.constant 0 : i32
    %c0_i32_0 = arith.constant 0 : i32
    %c0_i32_1 = arith.constant 0 : i32
    return %c0_i32, %c0_i32_0 : i32, i32
  }
  func.func @transform_6(%arg0: i32, %arg1: i32) -> (i32, i32, i32) {
    %c0_i32 = arith.constant 0 : i32
    %c0_i32_0 = arith.constant 0 : i32
    return %arg0, %arg1, %c0_i32 : i32, i32, i32
  }
}

</mosaic_0001>

<llo_original>
// kernel: tpu_custom_call.1
$region0: #{tpu_custom_call.1}
  #allocation0 [shape = 'u32[]', space=smem, size = 0x4, offset = 0x4, fixed_abs, tag = 'smem constant byte address 0x4 - core index']
  #allocation1 [shape = 'u32[72,128]{1,0:T(1,128)}', space=vmem, size = 0x9000, scoped, tag = 'internal scratch']
  #allocation2 [shape = 'f32[1,8,32]{2,1,0:T(8,128)}', space=vmem, size = 0x1000, scoped, tag = 'scratch operand']
  %s0 = inlined_call_operand.vmem [shape: f32[2,8,32], index: 0, kind: input, shape index: {}]
  %s1 = inlined_call_operand.vmem [shape: f32[2,24,8], index: 1, kind: input, shape index: {}]
  %s2 = inlined_call_operand.vmem [shape: f32[32,32], index: 2, kind: input, shape index: {}]
  %s3 = inlined_call_operand.vmem [shape: f32[1,32], index: 3, kind: input, shape index: {}]
  %s4 = inlined_call_operand.vmem [shape: f32[1,32], index: 4, kind: input, shape index: {}]
  %s5 = inlined_call_operand.vmem [shape: f32[1,32], index: 5, kind: input, shape index: {}]
  %s6 = inlined_call_operand.hbm [shape: f32[2,24,32], index: 6, kind: output, shape index: {}]
  %s7 = sld [smem:[#allocation0]]
  $region61: #{tpu_custom_call.1} parent=0
    _
  %s9 = ssub.s32 1, %s7
  %s10 = scalar_select 0, %s9, %s7
  $region1: #{tpu_custom_call.1} parent=0
    #allocation3 [shape = 'u8[24576]{0}', space=vmem, size = 0x6000, scoped, tag = 'output window, operand 0']
    #allocation4 [shape = 's32[2]{0}', space=sflag, size = 0x8, scoped, tag = 'scoped memory for tpu_custom_call.1']
    %11 = vsyncpa [#allocation4], 0
    %s12 = scalar_lea.sflag [#allocation4], 1
    %13 = vsyncpa %s12, 0
    loop: start=0, step=1, limit=4
    $region2: #{tpu_custom_call.1} parent=1 // loop_pre_header
      _
    $region3: #{tpu_custom_call.1} parent=1 // loop_header
      %s15 = sphi 0, %s19
      %p16 = scmp.ge.s32.totalorder %s15, 4
      %s22 = sphi 0, %s34
      %s23 = sphi 0, %s30
      %s24 = sphi 0, %s22
      %s25 = sphi 0, %s23
      %s26 = sphi 0, %s24
      %s27 = sphi 0, %s25
      %s37 = sphi 0, %s39
      %s40 = sphi 0, %s37
      %s41 = sphi 0, %s40
      %s57 = sphi 0, %s41
      %s65 = sphi 0, %s67
      %s68 = sphi 0, %s65
      %s69 = sphi 0, %s68
      %s85 = sphi 0, %s69
      %s89 = sphi 0, %s89
      %s91 = sphi 0, %s89
      %s92 = sphi 0, %s91
      %s106 = sphi 0, %s92
      %s110 = sphi 0, %s110
      %s112 = sphi 0, %s110
      %s113 = sphi 0, %s112
      %s127 = sphi 0, %s113
      %s131 = sphi 0, %s131
      %s133 = sphi 0, %s131
      %s134 = sphi 0, %s133
      %s148 = sphi 0, %s134
      %s152 = sphi 0, %s152
      %s154 = sphi 0, %s152
      %s155 = sphi 0, %s154
      %s169 = sphi 0, %s155
      %s177 = sphi 0, %s179
      %s180 = sphi 0, %s177
      %s181 = sphi 0, %s180
      %s197 = sphi 0, %s181
    $region4: #{tpu_custom_call.1} parent=1 // loop_header_branch
      %18 = sbr.rel (%p16) target = $region8
    $region5: #{tpu_custom_call.1} parent=1 // loop_body
      %s20 = ssub.s32 %s15, 1
      %s21 = ssub.s32 %s15, 2
      %s28 = sadd.s32 1, %s23
      %p29 = scmp.ge.s32.totalorder %s28, 1
      %s30 = scalar_select %p29, 0, %s28
      %s31 = sadd.s32 1, %s22
      %s32 = scalar_select %p29, %s31, %s22
      %p33 = scmp.ge.s32.totalorder %s32, 2
      %s34 = scalar_select %p33, 0, %s32
      %s35 = ssub.s32 %s22, %s34
      %p36 = scmp.eq.s32.totalorder %s35, 0
      %s38 = sadd.s32 %s37, 1
      %s39 = scalar_select %p36, %s37, %s38
      %p42 = pneg %p36
      %p43 = scmp.eq.s32.totalorder %s15, 1
      %p44 = por %p42, %p43
      %p45 = scmp.ne.s32.totalorder %s37, %s40
      %p46 = scmp.eq.s32.totalorder %s15, 0
      %p47 = por %p45, %p46
      %p48 = scmp.ne.s32.totalorder %s37, %s40
      %p49 = scmp.eq.s32.totalorder %s20, 1
      %p50 = por %p48, %p49
      %p51 = scmp.ne.s32.totalorder %s40, %s41
      %p52 = scmp.eq.s32.totalorder %s20, 0
      %p53 = por %p51, %p52
      %p54 = scmp.ne.s32.totalorder %s40, %s41
      %p55 = scmp.eq.s32.totalorder %s21, 1
      %p56 = por %p54, %p55
      %p58 = scmp.ne.s32.totalorder %s41, %s57
      %p59 = scmp.eq.s32.totalorder %s21, 0
      %p60 = por %p58, %p59
      %s61 = ssub.s32 %s22, %s34
      %s62 = ssub.s32 %s23, %s30
      %s63 = sor.u32 %s61, %s62
      %p64 = scmp.eq.s32.totalorder %s63, 0
      %s66 = sadd.s32 %s65, 1
      %s67 = scalar_select %p64, %s65, %s66
      %p70 = pneg %p64
      %p71 = scmp.eq.s32.totalorder %s15, 1
      %p72 = por %p70, %p71
      %p73 = scmp.ne.s32.totalorder %s65, %s68
      %p74 = scmp.eq.s32.totalorder %s15, 0
      %p75 = por %p73, %p74
      %p76 = scmp.ne.s32.totalorder %s65, %s68
      %p77 = scmp.eq.s32.totalorder %s20, 1
      %p78 = por %p76, %p77
      %p79 = scmp.ne.s32.totalorder %s68, %s69
      %p80 = scmp.eq.s32.totalorder %s20, 0
      %p81 = por %p79, %p80
      %p82 = scmp.ne.s32.totalorder %s68, %s69
      %p83 = scmp.eq.s32.totalorder %s21, 1
      %p84 = por %p82, %p83
      %p86 = scmp.ne.s32.totalorder %s69, %s85
      %p87 = scmp.eq.s32.totalorder %s21, 0
      %p88 = por %p86, %p87
      %s90 = sadd.s32 %s89, 1
      %p93 = scmp.eq.s32.totalorder %s15, 1
      %p94 = scmp.ne.s32.totalorder %s89, %s91
      %p95 = scmp.eq.s32.totalorder %s15, 0
      %p96 = por %p94, %p95
      %p97 = scmp.ne.s32.totalorder %s89, %s91
      %p98 = scmp.eq.s32.totalorder %s20, 1
      %p99 = por %p97, %p98
      %p100 = scmp.ne.s32.totalorder %s91, %s92
      %p101 = scmp.eq.s32.totalorder %s20, 0
      %p102 = por %p100, %p101
      %p103 = scmp.ne.s32.totalorder %s91, %s92
      %p104 = scmp.eq.s32.totalorder %s21, 1
      %p105 = por %p103, %p104
      %p107 = scmp.ne.s32.totalorder %s92, %s106
      %p108 = scmp.eq.s32.totalorder %s21, 0
      %p109 = por %p107, %p108
      %s111 = sadd.s32 %s110, 1
      %p114 = scmp.eq.s32.totalorder %s15, 1
      %p115 = scmp.ne.s32.totalorder %s110, %s112
      %p116 = scmp.eq.s32.totalorder %s15, 0
      %p117 = por %p115, %p116
      %p118 = scmp.ne.s32.totalorder %s110, %s112
      %p119 = scmp.eq.s32.totalorder %s20, 1
      %p120 = por %p118, %p119
      %p121 = scmp.ne.s32.totalorder %s112, %s113
      %p122 = scmp.eq.s32.totalorder %s20, 0
      %p123 = por %p121, %p122
      %p124 = scmp.ne.s32.totalorder %s112, %s113
      %p125 = scmp.eq.s32.totalorder %s21, 1
      %p126 = por %p124, %p125
      %p128 = scmp.ne.s32.totalorder %s113, %s127
      %p129 = scmp.eq.s32.totalorder %s21, 0
      %p130 = por %p128, %p129
      %s132 = sadd.s32 %s131, 1
      %p135 = scmp.eq.s32.totalorder %s15, 1
      %p136 = scmp.ne.s32.totalorder %s131, %s133
      %p137 = scmp.eq.s32.totalorder %s15, 0
      %p138 = por %p136, %p137
      %p139 = scmp.ne.s32.totalorder %s131, %s133
      %p140 = scmp.eq.s32.totalorder %s20, 1
      %p141 = por %p139, %p140
      %p142 = scmp.ne.s32.totalorder %s133, %s134
      %p143 = scmp.eq.s32.totalorder %s20, 0
      %p144 = por %p142, %p143
      %p145 = scmp.ne.s32.totalorder %s133, %s134
      %p146 = scmp.eq.s32.totalorder %s21, 1
      %p147 = por %p145, %p146
      %p149 = scmp.ne.s32.totalorder %s134, %s148
      %p150 = scmp.eq.s32.totalorder %s21, 0
      %p151 = por %p149, %p150
      %s153 = sadd.s32 %s152, 1
      %p156 = scmp.eq.s32.totalorder %s15, 1
      %p157 = scmp.ne.s32.totalorder %s152, %s154
      %p158 = scmp.eq.s32.totalorder %s15, 0
      %p159 = por %p157, %p158
      %p160 = scmp.ne.s32.totalorder %s152, %s154
      %p161 = scmp.eq.s32.totalorder %s20, 1
      %p162 = por %p160, %p161
      %p163 = scmp.ne.s32.totalorder %s154, %s155
      %p164 = scmp.eq.s32.totalorder %s20, 0
      %p165 = por %p163, %p164
      %p166 = scmp.ne.s32.totalorder %s154, %s155
      %p167 = scmp.eq.s32.totalorder %s21, 1
      %p168 = por %p166, %p167
      %p170 = scmp.ne.s32.totalorder %s155, %s169
      %p171 = scmp.eq.s32.totalorder %s21, 0
      %p172 = por %p170, %p171
      %s173 = ssub.s32 %s22, %s34
      %s174 = ssub.s32 %s23, %s30
      %s175 = sor.u32 %s173, %s174
      %p176 = scmp.eq.s32.totalorder %s175, 0
      %s178 = sadd.s32 %s177, 1
      %s179 = scalar_select %p176, %s177, %s178
      %p182 = pneg %p176
      %p183 = scmp.eq.s32.totalorder %s15, 1
      %p184 = por %p182, %p183
      %p185 = scmp.ne.s32.totalorder %s177, %s180
      %p186 = scmp.eq.s32.totalorder %s15, 0
      %p187 = por %p185, %p186
      %p188 = scmp.ne.s32.totalorder %s177, %s180
      %p189 = scmp.eq.s32.totalorder %s20, 1
      %p190 = por %p188, %p189
      %p191 = scmp.ne.s32.totalorder %s180, %s181
      %p192 = scmp.eq.s32.totalorder %s20, 0
      %p193 = por %p191, %p192
      %p194 = scmp.ne.s32.totalorder %s180, %s181
      %p195 = scmp.eq.s32.totalorder %s21, 1
      %p196 = por %p194, %p195
      %p198 = scmp.ne.s32.totalorder %s181, %s197
      %p199 = scmp.eq.s32.totalorder %s21, 0
      %p200 = por %p198, %p199
      %p201 = scmp.le.s32.totalorder 1, %s15
      %p202 = scmp.lt.s32.totalorder %s15, 3
      %p203 = pnand %p201, %p202
      %p204 = pneg %p203
      // Predicated region
      $region9: #{tpu_custom_call.1} parent=5 // pred_check
        _
      $region10: #{tpu_custom_call.1} parent=5 // pred_check_branch
        %206 = sbr.rel (%p203) target = $region12
      $region11: #{tpu_custom_call.1} parent=5 // pred_region
        %s207 = ssub.s32 %s15, 1
        // Predicated region
        $region13: #{tpu_custom_call.1} parent=11 // pred_check
          %p208 = pneg %p102
        $region14: #{tpu_custom_call.1} parent=11 // pred_check_branch
          %210 = sbr.rel (%p208) target = $region16
        $region15: #{tpu_custom_call.1} parent=11 // pred_region
          _
        $region16: #{tpu_custom_call.1} parent=11 // pred_fallthru
          _
        // Predicated region
        $region17: #{tpu_custom_call.1} parent=11 // pred_check
          %p211 = pneg %p123
        $region18: #{tpu_custom_call.1} parent=11 // pred_check_branch
          %213 = sbr.rel (%p211) target = $region20
        $region19: #{tpu_custom_call.1} parent=11 // pred_region
          _
        $region20: #{tpu_custom_call.1} parent=11 // pred_fallthru
          _
        // Predicated region
        $region21: #{tpu_custom_call.1} parent=11 // pred_check
          %p214 = pneg %p144
        $region22: #{tpu_custom_call.1} parent=11 // pred_check_branch
          %216 = sbr.rel (%p214) target = $region24
        $region23: #{tpu_custom_call.1} parent=11 // pred_region
          _
        $region24: #{tpu_custom_call.1} parent=11 // pred_fallthru
          _
        // Predicated region
        $region25: #{tpu_custom_call.1} parent=11 // pred_check
          %p217 = pneg %p165
        $region26: #{tpu_custom_call.1} parent=11 // pred_check_branch
          %219 = sbr.rel (%p217) target = $region28
        $region27: #{tpu_custom_call.1} parent=11 // pred_region
          _
        $region28: #{tpu_custom_call.1} parent=11 // pred_fallthru
          _
      $region12: #{tpu_custom_call.1} parent=5 // pred_fallthru
        _
      %p220 = scmp.lt.s32.totalorder %s15, 2
      // Predicated region
      $region29: #{tpu_custom_call.1} parent=5 // pred_check
        %p221 = pneg %p220
      $region30: #{tpu_custom_call.1} parent=5 // pred_check_branch
        %223 = sbr.rel (%p221) target = $region32
      $region31: #{tpu_custom_call.1} parent=5 // pred_region
        // Predicated region
        $region33: #{tpu_custom_call.1} parent=31 // pred_check
          %p224 = pneg %p47
        $region34: #{tpu_custom_call.1} parent=31 // pred_check_branch
          %226 = sbr.rel (%p224) target = $region36
        $region35: #{tpu_custom_call.1} parent=31 // pred_region
          %p227 = scmp.lt.s32.totalorder %s22, 1
          %s228 = scalar_select %p227, %s22, 1
          %s229 = smul.addr %s228, 8
          %s230 = scalar_lea.vmem %s0, %s229
        $region36: #{tpu_custom_call.1} parent=31 // pred_fallthru
          _
        // Predicated region
        $region37: #{tpu_custom_call.1} parent=31 // pred_check
          %p231 = pneg %p75
        $region38: #{tpu_custom_call.1} parent=31 // pred_check_branch
          %233 = sbr.rel (%p231) target = $region40
        $region39: #{tpu_custom_call.1} parent=31 // pred_region
          %s234 = smul.u32 3, %s23
          %p235 = scmp.lt.s32.totalorder %s22, 1
          %s236 = scalar_select %p235, %s22, 1
          %p237 = scmp.lt.s32.totalorder %s234, 2
          %s238 = scalar_select %p237, %s234, 2
          %s239 = smul.addr %s236, 3
          %s240 = sadd.s32 %s238, %s239
          %s241 = smul.addr %s240, 8
          %s242 = scalar_lea.vmem %s1, %s241
          %s243 = smul.u32 3, %s23
        $region40: #{tpu_custom_call.1} parent=31 // pred_fallthru
          _
      $region32: #{tpu_custom_call.1} parent=5 // pred_fallthru
        _
      %p244 = scmp.le.s32.totalorder 1, %s15
      %p245 = scmp.lt.s32.totalorder %s15, 3
      %p246 = pnand %p244, %p245
      %p247 = pneg %p246
      // Predicated region
      $region41: #{tpu_custom_call.1} parent=5 // pred_check
        _
      $region42: #{tpu_custom_call.1} parent=5 // pred_check_branch
        %249 = sbr.rel (%p246) target = $region44
      $region43: #{tpu_custom_call.1} parent=5 // pred_region
        %s250 = ssub.s32 %s15, 1
        %p251 = scmp.lt.s32.totalorder %s24, 1
        %s252 = scalar_select %p251, %s24, 1
        %s253 = smul.addr %s252, 8
        %s254 = scalar_lea.vmem %s0, %s253
        %p255 = pneg %p53
        %p256 = pneg %p50
        %s257 = smul.u32 3, %s25
        %p258 = scmp.lt.s32.totalorder %s24, 1
        %s259 = scalar_select %p258, %s24, 1
        %p260 = scmp.lt.s32.totalorder %s257, 2
        %s261 = scalar_select %p260, %s257, 2
        %s262 = smul.addr %s259, 3
        %s263 = sadd.s32 %s261, %s262
        %s264 = smul.addr %s263, 8
        %s265 = scalar_lea.vmem %s1, %s264
        %p266 = pneg %p81
        %p267 = pneg %p78
        %p268 = pneg %p102
        %p269 = pneg %p99
        %p270 = pneg %p123
        %p271 = pneg %p120
        %p272 = pneg %p144
        %p273 = pneg %p141
        %p274 = pneg %p165
        %p275 = pneg %p162
        %p276 = pneg %p193
        %p277 = pneg %p190
        %s278 = sand.u32 %s180, 1
        %s279 = scalar_lea.sflag [#allocation4], %s278
        %s280 = sand.u32 %s180, 1
        %s281 = smul.addr %s280, 24
        %s282 = scalar_lea.vmem [#allocation3], %s281
        %p283 = scmp.lt.s32.totalorder %s24, 1
        %s284 = scalar_select %p283, %s24, 1
        %s285 = smul.addr %s284, 8
        %s286 = scalar_lea.vmem %s0, %s285
        %s287 = smul.u32 3, %s25
        %p288 = scmp.lt.s32.totalorder %s24, 1
        %s289 = scalar_select %p288, %s24, 1
        %p290 = scmp.lt.s32.totalorder %s287, 2
        %s291 = scalar_select %p290, %s287, 2
        %s292 = smul.addr %s289, 3
        %s293 = sadd.s32 %s291, %s292
        %s294 = smul.addr %s293, 8
        %s295 = scalar_lea.vmem %s1, %s294
        %s296 = smul.u32 3, %s25
        %s297 = smul.u32 3, %s25
        %p298 = scmp.eq.s32.totalorder %s25, 0
        // Predicated region
        $region45: #{tpu_custom_call.1} parent=43 // pred_check
          %p299 = pneg %p298
        $region46: #{tpu_custom_call.1} parent=43 // pred_check_branch
          %301 = sbr.rel (%p299) target = $region48
        $region47: #{tpu_custom_call.1} parent=43 // pred_region
          %v302 = vld [vmem:[%s286] sm:$0xff]
          %v303 = vld [vmem:[%s2] sm:$0xff]
          %v304 = vld [vmem:[%s2 + $0x8] sm:$0xff]
          %v305 = vld [vmem:[%s2 + $0x10] sm:$0xff]
          %v306 = vld [vmem:[%s2 + $0x18] sm:$0xff]
          %v307 = vld [vmem:[%s3] sm:$0x1]
          %v309 = vperm.slane %v307, 0
          %vm311 = vcmask 261120
          %v313 = vsel %vm311, %v302, 0
          %315 = vmatpush.msra.mxu0 0.0
          %316 = vmatpush.msra.mxu0 0.0
          %317 = vmatpush.msra.mxu0 0.0
          %318 = vmatpush.msra.mxu0 0.0
          %319 = vmatpush.msra.mxu0 0.0
          %320 = vmatpush.msra.mxu0 0.0
          %321 = vmatpush.msra.mxu0 0.0
          %322 = vmatpush.msra.mxu0 0.0
          %323 = vmatpush.msra.mxu0 0.0
          %324 = vmatpush.msra.mxu0 0.0
          %325 = vmatpush.msra.mxu0 0.0
          %326 = vmatpush.msra.mxu0 0.0
          %327 = vmatpush.msra.mxu0 %v306
          %328 = vmatpush.msra.mxu0 %v305
          %329 = vmatpush.msra.mxu0 %v304
          %330 = vmatpush.msra.mxu0 %v303
          %331 = vmatmul.f32.gmra.mxu0 %v313
          %v332 = vpop.f32.mrf.mxu0
          %v333 = vadd.f32 %v309, %v332
          %334 = vdwg.mxu0
          %v335 = vsel %vm311, %v333, 0.0
          %336 = vadd.xlane.f32.xlu0 %v335
          %v337 = vpop.xlane.xlu0 %336
          %v338 = vrcp.pop 32.0
          %v339 = vmul.f32 32.0, %v338
          %v340 = vsub.f32 1.0, %v339
          %v341 = vmul.f32 %v338, %v340
          %v342 = vadd.f32 %v338, %v341
          %vm343 = vweird.f32 %v338
          %v344 = vsel %vm343, %v338, %v342
          %v345 = vmul.f32 %v337, %v344
          %v346 = vmul.f32 %v333, %v333
          %v347 = vsel %vm311, %v346, 0.0
          %348 = vadd.xlane.f32.xlu0 %v347
          %v349 = vpop.xlane.xlu0 %348
          %v350 = vmul.f32 %v349, %v344
          %v351 = vmul.f32 %v345, %v345
          %v352 = vsub.f32 %v350, %v351
          %v353 = vsub.f32 %v333, %v345
          %v354 = vadd.f32 %v352, 1e-05
          %v355 = vrsqrt.pop %v354
          %v356 = vmul.f32 %v355, %v354
          %v357 = vmul.f32 %v356, %v355
          %v358 = vmul.f32 0.5, %v357
          %v359 = vsub.f32 1.5, %v358
          %v360 = vmul.f32 %v355, %v359
          %vm361 = vweird.f32 %v354
          %vm362 = vweird.f32 %v355
          %vm363 = vmor %vm361, %vm362
          %v364 = vsel %vm363, %v355, %v360
          %v365 = vmul.f32 %v353, %v364
          %v366 = vld [vmem:[%s4] sm:$0x1]
          %v368 = vperm.slane %v366, 0
          %v370 = vmul.f32 %v365, %v368
          %v371 = vld [vmem:[%s5] sm:$0x1]
          %v373 = vperm.slane %v371, 0
          %v375 = vadd.f32 %v370, %v373
          %v376 = vxor.u32 %v375, 2147483648
          %v377 = vmul.f32 %v376, 1.442695
          %v378 = vpow.pop %v377
          %v379 = vadd.f32 %v378, 1.0
          %v380 = vrcp.pop %v379
          %v381 = vmul.f32 %v379, %v380
          %v382 = vsub.f32 1.0, %v381
          %v383 = vmul.f32 %v380, %v382
          %v384 = vadd.f32 %v380, %v383
          %vm385 = vweird.f32 %v379
          %vm386 = vweird.f32 %v380
          %vm387 = vmor %vm385, %vm386
          %v388 = vsel %vm387, %v380, %v384
          %v389 = vand.u32 2147483647, %v379
          %vm390 = vcmp.eq.f32.partialorder %v389, 8.507059e+37
          %v391 = vand.u32 %v379, 2147483648
          %v392 = vor.u32 1.1754944e-38, %v391
          %v393 = vsel %vm390, %v392, %v388
          %v394 = vmul.f32 1.0, %v393
          %v395 = vmul.f32 %v375, %v394
          %396 = vst.msk [vmem:[#allocation2] sm:$0xff] %vm311, %v395
        $region48: #{tpu_custom_call.1} parent=43 // pred_fallthru
          _
        %v397 = vld [vmem:[%s295] sm:$0xff]
        %v398 = vld [vmem:[%s295 + $0x8] sm:$0xff]
        %v399 = vld [vmem:[%s295 + $0x10] sm:$0xff]
        %v400 = vld [vmem:[#allocation2] sm:$0xff]
        %vm401 = vcmask 64512
        %v403 = vsel %vm401, %v397, 0
        %v406 = vsel %vm401, %v398, 0
        %v409 = vsel %vm401, %v399, 0
        %411 = vmatpush.msra.mxu0 0.0
        %412 = vmatpush.msra.mxu0 0.0
        %413 = vmatpush.msra.mxu0 0.0
        %414 = vmatpush.msra.mxu0 0.0
        %415 = vmatpush.msra.mxu0 0.0
        %416 = vmatpush.msra.mxu0 0.0
        %417 = vmatpush.msra.mxu0 0.0
        %418 = vmatpush.msra.mxu0 0.0
        %419 = vmatpush.msra.mxu0 0.0
        %420 = vmatpush.msra.mxu0 0.0
        %421 = vmatpush.msra.mxu0 0.0
        %422 = vmatpush.msra.mxu0 0.0
        %423 = vmatpush.msra.mxu0 0.0
        %424 = vmatpush.msra.mxu0 0.0
        %425 = vmatpush.msra.mxu0 0.0
        %426 = vmatpush.msra.mxu0 %v400
        %427 = vmatmul.f32.gmra.mxu0 %v403
        %v428 = vpop.f32.mrf.mxu0
        %v429 = vadd.f32 0.0, %v428
        %430 = vmatmul.f32.gmra.mxu0 %v406
        %v431 = vpop.f32.mrf.mxu0
        %v432 = vadd.f32 0.0, %v431
        %433 = vmatmul.f32.gmra.mxu0 %v409
        %v434 = vpop.f32.mrf.mxu0
        %v435 = vadd.f32 0.0, %v434
        %436 = vdwg.mxu0
        %vm437 = vcmask 261120
        %438 = vst.msk [vmem:[%s282] sm:$0xff] %vm437, %v429
        %439 = vst.msk [vmem:[%s282 + $0x8] sm:$0xff] %vm437, %v432
        %440 = vst.msk [vmem:[%s282 + $0x10] sm:$0xff] %vm437, %v435
        %s441 = sand.u32 %s180, 1
        %s442 = scalar_lea.sflag [#allocation4], %s441
        %s443 = sand.u32 %s180, 1
        %s444 = smul.addr %s443, 24
        %s445 = scalar_lea.vmem [#allocation3], %s444
        // Predicated region
        $region49: #{tpu_custom_call.1} parent=43 // pred_check
          %p446 = pneg %p190
        $region50: #{tpu_custom_call.1} parent=43 // pred_check_branch
          %448 = sbr.rel (%p446) target = $region52
        $region51: #{tpu_custom_call.1} parent=43 // pred_region
          %s449 = smul.u32 3, %s25
          %451 = vsyncadd %s442, 0
          %s452 = smul.addr %s24, 3
          %s453 = sadd.s32 %s449, %s452
          %s454 = smul.addr %s453, 8
          %s455 = scalar_lea.hbm %s6, %s454
          %s456 = sshll.u32 %s445, 4
          %s457 = int_to_ptr.vmem [resolvable:$true] %s456
          %s458 = sshll.u32 %s455, 4
          %s459 = int_to_ptr.hbm [resolvable:$true] %s458
          %464 = dma.vmem_to_hbm [thread:$0]  %s457, 384, %s459, %s442, 128, 128, 8
        $region52: #{tpu_custom_call.1} parent=43 // pred_fallthru
          _
      $region44: #{tpu_custom_call.1} parent=5 // pred_fallthru
        _
      %p465 = scmp.le.s32.totalorder 2, %s15
      // Predicated region
      $region53: #{tpu_custom_call.1} parent=5 // pred_check
        %p466 = pneg %p465
      $region54: #{tpu_custom_call.1} parent=5 // pred_check_branch
        %468 = sbr.rel (%p466) target = $region56
      $region55: #{tpu_custom_call.1} parent=5 // pred_region
        %s469 = ssub.s32 %s15, 2
        // Predicated region
        $region57: #{tpu_custom_call.1} parent=55 // pred_check
          %p470 = pneg %p196
        $region58: #{tpu_custom_call.1} parent=55 // pred_check_branch
          %472 = sbr.rel (%p470) target = $region60
        $region59: #{tpu_custom_call.1} parent=55 // pred_region
          %s473 = sand.u32 %s181, 1
          %s474 = scalar_lea.sflag [#allocation4], %s473
          %s475 = sand.u32 %s181, 1
          %s476 = smul.addr %s475, 24
          %s477 = scalar_lea.vmem [#allocation3], %s476
          %479 = dma.done %s474, 384
        $region60: #{tpu_custom_call.1} parent=55 // pred_fallthru
          _
      $region56: #{tpu_custom_call.1} parent=5 // pred_fallthru
        _
    $region6: #{tpu_custom_call.1} parent=1 // loop_footer
      %s19 = sadd.s32 1, %s15
    $region7: #{tpu_custom_call.1} parent=1 // loop_footer_branch
      %14 = sbr.rel target = $region3
    $region8: #{tpu_custom_call.1} parent=1 // loop_exit
      _
    %480 = vsyncpa [#allocation4], 1
    %s481 = scalar_lea.sflag [#allocation4], 1
    %482 = vsyncpa %s481, 1

</llo_original>
